<compile_context>
chip_gen: v7x
topology: tpu7x:2x2x1
jax: 0.10.0
libtpu: 0.0.40
codegen_flags: <defaults>
</compile_context>

<pallas_src>
import jax
import jax.numpy as jnp
from jax.experimental import pallas as pl
from jax.experimental.pallas import tpu as pltpu

# Model dimensions (consistent with the module's constructor).
S_TASK_DIM = 6
S_VM_DIM = 10
A_DIM = 4
BATCH = 8
BN_EPS = 1e-5
LANE = 128  # padded feature width used for every activation inside the kernel

# Column layout of the padded [B, 128] activation inside the kernel:
#   [ 0:16)  layer1_task output   (16)
#   [16:48)  layer1_1vm  output   (32)
#   [48:64)  layer1_2vm  output   (16)
#   [64:128) always zero


def _leaky_relu(x):
    return jnp.where(x > 0, x, 0.01 * x)


def qnet_kernel(x_ref, w_ref, b_ref, out_ref):
    """Whole QNet_v1 eval-mode forward, one un-gridded invocation.

    x_ref  : [B, 128]       bf16  zero-padded input (task feats then vm feats)
    w_ref  : [4, 128, 128]  bf16  packed, BN-folded, block-diagonal weights
    b_ref  : [4, 1, 128]    f32   packed, BN-folded biases
    out_ref: [B, 128]       f32   columns [0:A_DIM) hold the Q-values
    """
    # Stage 0: layer1_task + layer1_1vm as one block-diagonal matmul
    # (Dropout is identity in eval mode; BN folded into W/b).
    h = _leaky_relu(
        jnp.dot(x_ref[...], w_ref[0], preferred_element_type=jnp.float32)
        + b_ref[0])

    # Stage 1: layer1_2vm reads cols [16:48), writes cols [48:64).
    # All other columns of the update are exactly zero (zero weight rows/cols
    # and zero bias there), so the add is equivalent to
    # torch.cat((x1, x2), dim=1) without a lane concat.
    h = h + _leaky_relu(
        jnp.dot(h.astype(jnp.bfloat16), w_ref[1],
                preferred_element_type=jnp.float32)
        + b_ref[1])

    # Stage 2: layer2 reads cols [0:16) and [48:64), writes cols [0:16).
    h = _leaky_relu(
        jnp.dot(h.astype(jnp.bfloat16), w_ref[2],
                preferred_element_type=jnp.float32)
        + b_ref[2])

    # Stage 3: layer3 (Linear only), writes cols [0:A_DIM).
    out = (jnp.dot(h.astype(jnp.bfloat16), w_ref[3],
                   preferred_element_type=jnp.float32)
           + b_ref[3])
    out_ref[...] = out.astype(out_ref.dtype)


def init_params(key):
    """Deterministic synthetic parameters (same shapes as the PyTorch module).

    Linear weights are stored already transposed as [in, out]; BN params are
    (gamma, beta, running_mean, running_var).
    """
    def dense(key, fan_in, fan_out):
        kw, kb = jax.random.split(key)
        w = jax.random.normal(kw, (fan_in, fan_out), jnp.float32) * 0.1
        b = jax.random.normal(kb, (fan_out,), jnp.float32) * 0.1
        return w, b

    def bn(key, feat):
        kg, kb, km, kv = jax.random.split(key, 4)
        gamma = 1.0 + 0.1 * jax.random.normal(kg, (feat,), jnp.float32)
        beta = 0.1 * jax.random.normal(kb, (feat,), jnp.float32)
        mean = 0.1 * jax.random.normal(km, (feat,), jnp.float32)
        var = jnp.abs(jax.random.normal(kv, (feat,), jnp.float32)) + 0.5
        return gamma, beta, mean, var

    keys = jax.random.split(key, 9)
    return dict(
        lin1t=dense(keys[0], S_TASK_DIM, 16), bn1t=bn(keys[1], 16),
        lin1v=dense(keys[2], S_VM_DIM, 32),   bn1v=bn(keys[3], 32),
        lin2v=dense(keys[4], 32, 16),         bn2v=bn(keys[5], 16),
        lin2=dense(keys[6], 32, 16),          bn2=bn(keys[7], 16),
        lin3=dense(keys[8], 16, A_DIM),
    )


def _fold_linear_bn(lin, bn):
    """Fold eval-mode BatchNorm into the preceding Linear: y = x @ W' + b'."""
    w, b = lin
    gamma, beta, mean, var = bn
    scale = gamma * jax.lax.rsqrt(var + BN_EPS)       # [out]
    return w * scale, b * scale + (beta - mean * scale)


def pack_params(raw):
    """Fold BN + bias into weights and pack everything into two slabs."""
    w1t, b1t = _fold_linear_bn(raw["lin1t"], raw["bn1t"])   # [6, 16],  [16]
    w1v, b1v = _fold_linear_bn(raw["lin1v"], raw["bn1v"])   # [10, 32], [32]
    w2v, b2v = _fold_linear_bn(raw["lin2v"], raw["bn2v"])   # [32, 16], [16]
    w2,  b2  = _fold_linear_bn(raw["lin2"],  raw["bn2"])    # [32, 16], [16]
    w3,  b3  = raw["lin3"]                                  # [16, 4],  [4]

    w_slab = jnp.zeros((4, LANE, LANE), jnp.float32)
    b_slab = jnp.zeros((4, 1, LANE), jnp.float32)

    # Stage 0: block-diag(layer1_task, layer1_1vm).
    w_slab = w_slab.at[0, 0:S_TASK_DIM, 0:16].set(w1t)
    w_slab = w_slab.at[0, S_TASK_DIM:S_TASK_DIM + S_VM_DIM, 16:48].set(w1v)
    b_slab = b_slab.at[0, 0, 0:16].set(b1t).at[0, 0, 16:48].set(b1v)

    # Stage 1: layer1_2vm, cols [16:48) -> cols [48:64).
    w_slab = w_slab.at[1, 16:48, 48:64].set(w2v)
    b_slab = b_slab.at[1, 0, 48:64].set(b2v)

    # Stage 2: layer2 on cat(h1, h2) = (cols [0:16), cols [48:64)) -> cols [0:16).
    w_slab = w_slab.at[2, 0:16, 0:16].set(w2[0:16, :])
    w_slab = w_slab.at[2, 48:64, 0:16].set(w2[16:32, :])
    b_slab = b_slab.at[2, 0, 0:16].set(b2)

    # Stage 3: layer3, cols [0:16) -> cols [0:A_DIM).
    w_slab = w_slab.at[3, 0:16, 0:A_DIM].set(w3)
    b_slab = b_slab.at[3, 0, 0:A_DIM].set(b3)

    w_slab = w_slab.astype(jnp.bfloat16)   # MXU-native inputs (f32 accumulate)
    return w_slab, b_slab                  # biases stay f32 for the VPU


@jax.jit
def qnet_forward(x, w_slab, b_slab):
    batch, feat = x.shape
    # Zero-pad the input to a lane-dense [B, 128] bf16 tile in the wrapper
    # (avoids the non-aligned lane slice at offset 6 inside the kernel).
    x_pad = jnp.zeros((batch, LANE), jnp.bfloat16).at[:, :feat].set(
        x.astype(jnp.bfloat16))

    vmem = pl.BlockSpec(memory_space=pltpu.MemorySpace.VMEM)
    out = pl.pallas_call(
        qnet_kernel,
        out_shape=jax.ShapeDtypeStruct((batch, LANE), jnp.float32),
        in_specs=[vmem, vmem, vmem],
        out_specs=vmem,
        compiler_params=pltpu.CompilerParams(vmem_limit_bytes=8 << 20),
    )(x_pad, w_slab, b_slab)
    return out[:, :A_DIM]


def qnet_reference(x, raw):
    """Plain-JAX f32 reference of the same eval-mode forward pass."""
    def block(h, lin, bn):
        w, b = lin
        gamma, beta, mean, var = bn
        y = h @ w + b
        y = (y - mean) * gamma * jax.lax.rsqrt(var + BN_EPS) + beta
        return _leaky_relu(y)

    x1 = block(x[:, :S_TASK_DIM], raw["lin1t"], raw["bn1t"])
    x2 = block(x[:, S_TASK_DIM:], raw["lin1v"], raw["bn1v"])
    x2 = block(x2, raw["lin2v"], raw["bn2v"])
    h = jnp.concatenate([x1, x2], axis=1)
    h = block(h, raw["lin2"], raw["bn2"])
    w3, b3 = raw["lin3"]
    return h @ w3 + b3


if __name__ == "__main__":
    key = jax.random.PRNGKey(0)
    kx, kp = jax.random.split(key)
    x = jax.random.normal(kx, (BATCH, S_TASK_DIM + S_VM_DIM), jnp.float32)
    raw = init_params(kp)
    w_slab, b_slab = pack_params(raw)

    out = qnet_forward(x, w_slab, b_slab)
    out = jax.block_until_ready(out)

    ref = qnet_reference(x, raw)
    assert out.shape == (BATCH, A_DIM)
    # bf16 MXU inputs (f32 accumulation) -> slightly looser tolerance vs pure f32.
    err = float(jnp.max(jnp.abs(out - ref)))
    assert jnp.allclose(out, ref, atol=2e-2, rtol=2e-2), f"max abs err {err}"
    print("KERNEL_OK")
</pallas_src>

<mosaic_0001>
module attributes {stable_mosaic.version = 11 : i64} {
  func.func @qnet_kernel(%arg0: memref<8x128xbf16, #tpu.memory_space<vmem>>, %arg1: memref<4x128x128xbf16, #tpu.memory_space<vmem>>, %arg2: memref<4x1x128xf32, #tpu.memory_space<vmem>>, %arg3: memref<8x128xf32, #tpu.memory_space<vmem>>) attributes {dimension_semantics = [], scalar_prefetch = 0 : i64, scratch_operands = 0 : i64, tpu.core_type = #tpu.core_type<tc>} {
    %c0 = arith.constant 0 : index
    %c0_0 = arith.constant 0 : index
    %0 = vector.load %arg0[%c0, %c0_0] : memref<8x128xbf16, #tpu.memory_space<vmem>>, vector<8x128xbf16>
    %c0_1 = arith.constant 0 : index
    %c0_2 = arith.constant 0 : index
    %c0_3 = arith.constant 0 : index
    %1 = vector.load %arg1[%c0_1, %c0_2, %c0_3] : memref<4x128x128xbf16, #tpu.memory_space<vmem>>, vector<1x128x128xbf16>
    %2 = vector.shape_cast %1 : vector<1x128x128xbf16> to vector<128x128xbf16>
    %cst = arith.constant dense<0.000000e+00> : vector<8x128xf32>
    %3 = tpu.matmul %0, %2, %cst {dimension_numbers = #tpu.dot_dimension_numbers<[1], [0], [0], [1], [0, 0, 1, 1], [], []>} : vector<8x128xbf16>, vector<128x128xbf16>, vector<8x128xf32> -> vector<8x128xf32>
    %c0_4 = arith.constant 0 : index
    %c0_5 = arith.constant 0 : index
    %c0_6 = arith.constant 0 : index
    %4 = vector.load %arg2[%c0_4, %c0_5, %c0_6] : memref<4x1x128xf32, #tpu.memory_space<vmem>>, vector<1x1x128xf32>
    %5 = vector.shape_cast %4 : vector<1x1x128xf32> to vector<1x128xf32>
    %6 = vector.broadcast %5 : vector<1x128xf32> to vector<8x128xf32>
    %7 = arith.addf %3, %6 : vector<8x128xf32>
    %cst_7 = arith.constant 0.000000e+00 : f32
    %8 = vector.broadcast %cst_7 : f32 to vector<8x128xf32>
    %9 = arith.cmpf ogt, %7, %8 : vector<8x128xf32>
    %cst_8 = arith.constant 0.00999999977 : f32
    %10 = vector.broadcast %cst_8 : f32 to vector<8x128xf32>
    %11 = arith.mulf %10, %7 : vector<8x128xf32>
    %12 = arith.select %9, %7, %11 : vector<8x128xi1>, vector<8x128xf32>
    %13 = arith.truncf %12 : vector<8x128xf32> to vector<8x128xbf16>
    %c1 = arith.constant 1 : index
    %c0_9 = arith.constant 0 : index
    %c0_10 = arith.constant 0 : index
    %14 = vector.load %arg1[%c1, %c0_9, %c0_10] : memref<4x128x128xbf16, #tpu.memory_space<vmem>>, vector<1x128x128xbf16>
    %15 = vector.shape_cast %14 : vector<1x128x128xbf16> to vector<128x128xbf16>
    %cst_11 = arith.constant dense<0.000000e+00> : vector<8x128xf32>
    %16 = tpu.matmul %13, %15, %cst_11 {dimension_numbers = #tpu.dot_dimension_numbers<[1], [0], [0], [1], [0, 0, 1, 1], [], []>} : vector<8x128xbf16>, vector<128x128xbf16>, vector<8x128xf32> -> vector<8x128xf32>
    %c1_12 = arith.constant 1 : index
    %c0_13 = arith.constant 0 : index
    %c0_14 = arith.constant 0 : index
    %17 = vector.load %arg2[%c1_12, %c0_13, %c0_14] : memref<4x1x128xf32, #tpu.memory_space<vmem>>, vector<1x1x128xf32>
    %18 = vector.shape_cast %17 : vector<1x1x128xf32> to vector<1x128xf32>
    %19 = vector.broadcast %18 : vector<1x128xf32> to vector<8x128xf32>
    %20 = arith.addf %16, %19 : vector<8x128xf32>
    %cst_15 = arith.constant 0.000000e+00 : f32
    %21 = vector.broadcast %cst_15 : f32 to vector<8x128xf32>
    %22 = arith.cmpf ogt, %20, %21 : vector<8x128xf32>
    %cst_16 = arith.constant 0.00999999977 : f32
    %23 = vector.broadcast %cst_16 : f32 to vector<8x128xf32>
    %24 = arith.mulf %23, %20 : vector<8x128xf32>
    %25 = arith.select %22, %20, %24 : vector<8x128xi1>, vector<8x128xf32>
    %26 = arith.addf %12, %25 : vector<8x128xf32>
    %27 = arith.truncf %26 : vector<8x128xf32> to vector<8x128xbf16>
    %c2 = arith.constant 2 : index
    %c0_17 = arith.constant 0 : index
    %c0_18 = arith.constant 0 : index
    %28 = vector.load %arg1[%c2, %c0_17, %c0_18] : memref<4x128x128xbf16, #tpu.memory_space<vmem>>, vector<1x128x128xbf16>
    %29 = vector.shape_cast %28 : vector<1x128x128xbf16> to vector<128x128xbf16>
    %cst_19 = arith.constant dense<0.000000e+00> : vector<8x128xf32>
    %30 = tpu.matmul %27, %29, %cst_19 {dimension_numbers = #tpu.dot_dimension_numbers<[1], [0], [0], [1], [0, 0, 1, 1], [], []>} : vector<8x128xbf16>, vector<128x128xbf16>, vector<8x128xf32> -> vector<8x128xf32>
    %c2_20 = arith.constant 2 : index
    %c0_21 = arith.constant 0 : index
    %c0_22 = arith.constant 0 : index
    %31 = vector.load %arg2[%c2_20, %c0_21, %c0_22] : memref<4x1x128xf32, #tpu.memory_space<vmem>>, vector<1x1x128xf32>
    %32 = vector.shape_cast %31 : vector<1x1x128xf32> to vector<1x128xf32>
    %33 = vector.broadcast %32 : vector<1x128xf32> to vector<8x128xf32>
    %34 = arith.addf %30, %33 : vector<8x128xf32>
    %cst_23 = arith.constant 0.000000e+00 : f32
    %35 = vector.broadcast %cst_23 : f32 to vector<8x128xf32>
    %36 = arith.cmpf ogt, %34, %35 : vector<8x128xf32>
    %cst_24 = arith.constant 0.00999999977 : f32
    %37 = vector.broadcast %cst_24 : f32 to vector<8x128xf32>
    %38 = arith.mulf %37, %34 : vector<8x128xf32>
    %39 = arith.select %36, %34, %38 : vector<8x128xi1>, vector<8x128xf32>
    %40 = arith.truncf %39 : vector<8x128xf32> to vector<8x128xbf16>
    %c3 = arith.constant 3 : index
    %c0_25 = arith.constant 0 : index
    %c0_26 = arith.constant 0 : index
    %41 = vector.load %arg1[%c3, %c0_25, %c0_26] : memref<4x128x128xbf16, #tpu.memory_space<vmem>>, vector<1x128x128xbf16>
    %42 = vector.shape_cast %41 : vector<1x128x128xbf16> to vector<128x128xbf16>
    %cst_27 = arith.constant dense<0.000000e+00> : vector<8x128xf32>
    %43 = tpu.matmul %40, %42, %cst_27 {dimension_numbers = #tpu.dot_dimension_numbers<[1], [0], [0], [1], [0, 0, 1, 1], [], []>} : vector<8x128xbf16>, vector<128x128xbf16>, vector<8x128xf32> -> vector<8x128xf32>
    %c3_28 = arith.constant 3 : index
    %c0_29 = arith.constant 0 : index
    %c0_30 = arith.constant 0 : index
    %44 = vector.load %arg2[%c3_28, %c0_29, %c0_30] : memref<4x1x128xf32, #tpu.memory_space<vmem>>, vector<1x1x128xf32>
    %45 = vector.shape_cast %44 : vector<1x1x128xf32> to vector<1x128xf32>
    %46 = vector.broadcast %45 : vector<1x128xf32> to vector<8x128xf32>
    %47 = arith.addf %43, %46 : vector<8x128xf32>
    %c0_31 = arith.constant 0 : index
    %c0_32 = arith.constant 0 : index
    %48 = vector.load %arg3[%c0_31, %c0_32] : memref<8x128xf32, #tpu.memory_space<vmem>>, vector<8x128xf32>
    tpu.vector_store %arg3[%c0_31, %c0_32], %47 {strides = array<i32>} : memref<8x128xf32, #tpu.memory_space<vmem>>, vector<8x128xf32>,
    return
  }
}

</mosaic_0001>

<llo_original>
// kernel: qnet_forward.1
$region0: #{qnet_forward.1}
  #allocation0 [shape = 'u32[]', space=smem, size = 0x4, offset = 0x4, fixed_abs, tag = 'smem constant byte address 0x4 - core index']
  #allocation1 [shape = 'u32[144,128]{1,0:T(1,128)}', space=vmem, size = 0x12000, scoped, tag = 'internal scratch']
  %s0 = inlined_call_operand.vmem [shape: bf16[8,128], index: 0, kind: input, shape index: {}]
  %s1 = inlined_call_operand.hbm [shape: bf16[4,128,128], index: 1, kind: input, shape index: {}]
  %s2 = inlined_call_operand.vmem [shape: f32[4,1,128], index: 2, kind: input, shape index: {}]
  %s3 = inlined_call_operand.vmem [shape: f32[8,128], index: 3, kind: output, shape index: {}]
  %s4 = sld [smem:[#allocation0]]
  $region26: #{qnet_forward.1} parent=0
    _
  %s6 = ssub.s32 1, %s4
  %s7 = scalar_select 0, %s6, %s4
  $region1: #{qnet_forward.1} parent=0
    #allocation2 [shape = 'u8[131072]{0}', space=vmem, size = 0x20000, scoped, tag = 'input window, operand 1, single buffered']
    #allocation3 [shape = 's32[1]{0}', space=sflag, size = 0x4, scoped, tag = 'scoped memory for qnet_forward.1']
    %8 = vsyncpa [#allocation3], 0
    // Predicated region
    $region2: #{qnet_forward.1} parent=1 // pred_check
      _
    $region3: #{qnet_forward.1} parent=1 // pred_check_branch
      %10 = sbr.rel (0) target = $region5
    $region4: #{qnet_forward.1} parent=1 // pred_region
      _
    $region5: #{qnet_forward.1} parent=1 // pred_fallthru
      _
    // Predicated region
    $region6: #{qnet_forward.1} parent=1 // pred_check
      _
    $region7: #{qnet_forward.1} parent=1 // pred_check_branch
      %12 = sbr.rel (0) target = $region9
    $region8: #{qnet_forward.1} parent=1 // pred_region
      %s14 = ssub.s32 4096, 4096
      %15 = vsyncadd [#allocation3], %s14
      %s16 = sshll.u32 [#allocation2], 4
      %s17 = int_to_ptr.vmem [resolvable:$true] %s16
      %22 = dma.hbm_to_vmem [thread:$0]  %s1, 4096, %s17, [#allocation3], 64, 64, 4
    $region9: #{qnet_forward.1} parent=1 // pred_fallthru
      _
    // Predicated region
    $region10: #{qnet_forward.1} parent=1 // pred_check
      _
    $region11: #{qnet_forward.1} parent=1 // pred_check_branch
      %24 = sbr.rel (0) target = $region13
    $region12: #{qnet_forward.1} parent=1 // pred_region
      _
    $region13: #{qnet_forward.1} parent=1 // pred_fallthru
      _
    // Predicated region
    $region14: #{qnet_forward.1} parent=1 // pred_check
      _
    $region15: #{qnet_forward.1} parent=1 // pred_check_branch
      %26 = sbr.rel (0) target = $region17
    $region16: #{qnet_forward.1} parent=1 // pred_region
      %27 = dma.done [#allocation3], 4096
    $region17: #{qnet_forward.1} parent=1 // pred_fallthru
      _
    %v29 = vld [vmem:[%s0] sm:$0xf]
    %v30 = vld [vmem:[#allocation2] sm:$0xf]
    %v31 = vld [vmem:[#allocation2 + $0x4] sm:$0xf]
    %v32 = vld [vmem:[#allocation2 + $0x8] sm:$0xf]
    %v33 = vld [vmem:[#allocation2 + $0xc] sm:$0xf]
    %v34 = vld [vmem:[#allocation2 + $0x10] sm:$0xf]
    %v35 = vld [vmem:[#allocation2 + $0x14] sm:$0xf]
    %v36 = vld [vmem:[#allocation2 + $0x18] sm:$0xf]
    %v37 = vld [vmem:[#allocation2 + $0x1c] sm:$0xf]
    %v38 = vld [vmem:[#allocation2 + $0x20] sm:$0xf]
    %v39 = vld [vmem:[#allocation2 + $0x24] sm:$0xf]
    %v40 = vld [vmem:[#allocation2 + $0x28] sm:$0xf]
    %v41 = vld [vmem:[#allocation2 + $0x2c] sm:$0xf]
    %v42 = vld [vmem:[#allocation2 + $0x30] sm:$0xf]
    %v43 = vld [vmem:[#allocation2 + $0x34] sm:$0xf]
    %v44 = vld [vmem:[#allocation2 + $0x38] sm:$0xf]
    %v45 = vld [vmem:[#allocation2 + $0x3c] sm:$0xf]
    %v46 = vld [vmem:[%s2] sm:$0x1]
    %v48 = vlaneseq
    %v49 = vshrl.u32 %v48, 7
    %v50 = vsub.s32 0, %v49
    %v51 = vrot.slane %v46, %v50
    %v69 = vunpack.c.l.b16 %v30
    %v70 = vunpack.c.l.b16 %v31
    %v71 = vunpack.c.l.b16 %v32
    %v72 = vunpack.c.l.b16 %v33
    %v73 = vunpack.c.l.b16 %v34
    %v74 = vunpack.c.l.b16 %v35
    %v75 = vunpack.c.l.b16 %v36
    %v76 = vunpack.c.l.b16 %v37
    %v77 = vunpack.c.l.b16 %v38
    %v78 = vunpack.c.l.b16 %v39
    %v79 = vunpack.c.l.b16 %v40
    %v80 = vunpack.c.l.b16 %v41
    %v81 = vunpack.c.l.b16 %v42
    %v82 = vunpack.c.l.b16 %v43
    %v83 = vunpack.c.l.b16 %v44
    %v84 = vunpack.c.l.b16 %v45
    %v85 = vpack.c.b16 %v70, %v69
    %v86 = vpack.c.b16 %v72, %v71
    %v87 = vpack.c.b16 %v74, %v73
    %v88 = vpack.c.b16 %v76, %v75
    %v89 = vpack.c.b16 %v78, %v77
    %v90 = vpack.c.b16 %v80, %v79
    %v91 = vpack.c.b16 %v82, %v81
    %v92 = vpack.c.b16 %v84, %v83
    %101 = vmatprep.subr.bf16.mxu0 0
    %102 = vmatpush1.bf16.msra.mxu0 %v85
    %103 = vmatprep.subr.bf16.mxu0 0
    %104 = vmatpush1.bf16.msra.mxu0 %v86
    %105 = vmatprep.subr.bf16.mxu0 0
    %106 = vmatpush1.bf16.msra.mxu0 %v87
    %107 = vmatprep.subr.bf16.mxu0 0
    %108 = vmatpush1.bf16.msra.mxu0 %v88
    %109 = vmatprep.subr.bf16.mxu0 0
    %110 = vmatpush1.bf16.msra.mxu0 %v89
    %111 = vmatprep.subr.bf16.mxu0 0
    %112 = vmatpush1.bf16.msra.mxu0 %v90
    %113 = vmatprep.subr.bf16.mxu0 0
    %114 = vmatpush1.bf16.msra.mxu0 %v91
    %115 = vmatprep.subr.bf16.mxu0 0
    %116 = vmatpush1.bf16.msra.mxu0 %v92
    %117 = vmatprep.subr.bf16.mxu0 0
    %118 = vmatpush1.bf16.msra.mxu0 0
    %119 = vmatprep.subr.bf16.mxu0 0
    %120 = vmatpush1.bf16.msra.mxu0 0
    %121 = vmatprep.subr.bf16.mxu0 0
    %122 = vmatpush1.bf16.msra.mxu0 0
    %123 = vmatprep.subr.bf16.mxu0 0
    %124 = vmatpush1.bf16.msra.mxu0 0
    %125 = vmatprep.subr.bf16.mxu0 0
    %126 = vmatpush1.bf16.msra.mxu0 0
    %127 = vmatprep.subr.bf16.mxu0 0
    %128 = vmatpush1.bf16.msra.mxu0 0
    %129 = vmatprep.subr.bf16.mxu0 0
    %130 = vmatpush1.bf16.msra.mxu0 0
    %131 = vmatprep.subr.bf16.mxu0 0
    %132 = vmatpush1.bf16.msra.mxu0 0
    %133 = vmatprep.mubr.bf16.mxu0 0
    %134 = vmatmul.mubr.bf16.gmra.mrb[0].mxu0 %v29
    %v135 = vpop.f32.mrb[0].mxu0
    %v136 = vadd.f32 %v51, %v135
    %v137 = vpop.f32.mrb[0].mxu0
    %v138 = vpop.f32.mrb[0].mxu0
    %v139 = vpop.f32.mrb[0].mxu0
    %140 = vdwg.mxu0
    %vm141 = vcmp.gt.f32.partialorder %v136, 0.0
    %v142 = vmul.f32 %v136, 0.01
    %v143 = vsel %vm141, %v136, %v142
    %v144 = vpack.c.bf16 %v143, %v143
    %s145 = scalar_lea.vmem [#allocation2], 64
    %v146 = vld [vmem:[%s145] sm:$0xf]
    %v147 = vld [vmem:[%s145 + $0x4] sm:$0xf]
    %v148 = vld [vmem:[%s145 + $0x8] sm:$0xf]
    %v149 = vld [vmem:[%s145 + $0xc] sm:$0xf]
    %v150 = vld [vmem:[%s145 + $0x10] sm:$0xf]
    %v151 = vld [vmem:[%s145 + $0x14] sm:$0xf]
    %v152 = vld [vmem:[%s145 + $0x18] sm:$0xf]
    %v153 = vld [vmem:[%s145 + $0x1c] sm:$0xf]
    %v154 = vld [vmem:[%s145 + $0x20] sm:$0xf]
    %v155 = vld [vmem:[%s145 + $0x24] sm:$0xf]
    %v156 = vld [vmem:[%s145 + $0x28] sm:$0xf]
    %v157 = vld [vmem:[%s145 + $0x2c] sm:$0xf]
    %v158 = vld [vmem:[%s145 + $0x30] sm:$0xf]
    %v159 = vld [vmem:[%s145 + $0x34] sm:$0xf]
    %v160 = vld [vmem:[%s145 + $0x38] sm:$0xf]
    %v161 = vld [vmem:[%s145 + $0x3c] sm:$0xf]
    %s162 = scalar_lea.vmem %s2, 1
    %v163 = vld [vmem:[%s162] sm:$0x1]
    %v165 = vlaneseq
    %v166 = vshrl.u32 %v165, 7
    %v167 = vsub.s32 0, %v166
    %v168 = vrot.slane %v163, %v167
    %v186 = vunpack.c.l.b16 %v146
    %v187 = vunpack.c.l.b16 %v147
    %v188 = vunpack.c.l.b16 %v148
    %v189 = vunpack.c.l.b16 %v149
    %v190 = vunpack.c.l.b16 %v150
    %v191 = vunpack.c.l.b16 %v151
    %v192 = vunpack.c.l.b16 %v152
    %v193 = vunpack.c.l.b16 %v153
    %v194 = vunpack.c.l.b16 %v154
    %v195 = vunpack.c.l.b16 %v155
    %v196 = vunpack.c.l.b16 %v156
    %v197 = vunpack.c.l.b16 %v157
    %v198 = vunpack.c.l.b16 %v158
    %v199 = vunpack.c.l.b16 %v159
    %v200 = vunpack.c.l.b16 %v160
    %v201 = vunpack.c.l.b16 %v161
    %v202 = vpack.c.b16 %v187, %v186
    %v203 = vpack.c.b16 %v189, %v188
    %v204 = vpack.c.b16 %v191, %v190
    %v205 = vpack.c.b16 %v193, %v192
    %v206 = vpack.c.b16 %v195, %v194
    %v207 = vpack.c.b16 %v197, %v196
    %v208 = vpack.c.b16 %v199, %v198
    %v209 = vpack.c.b16 %v201, %v200
    %218 = vmatprep.subr.bf16.mxu0 0
    %219 = vmatpush1.bf16.msra.mxu0 %v202
    %220 = vmatprep.subr.bf16.mxu0 0
    %221 = vmatpush1.bf16.msra.mxu0 %v203
    %222 = vmatprep.subr.bf16.mxu0 0
    %223 = vmatpush1.bf16.msra.mxu0 %v204
    %224 = vmatprep.subr.bf16.mxu0 0
    %225 = vmatpush1.bf16.msra.mxu0 %v205
    %226 = vmatprep.subr.bf16.mxu0 0
    %227 = vmatpush1.bf16.msra.mxu0 %v206
    %228 = vmatprep.subr.bf16.mxu0 0
    %229 = vmatpush1.bf16.msra.mxu0 %v207
    %230 = vmatprep.subr.bf16.mxu0 0
    %231 = vmatpush1.bf16.msra.mxu0 %v208
    %232 = vmatprep.subr.bf16.mxu0 0
    %233 = vmatpush1.bf16.msra.mxu0 %v209
    %234 = vmatprep.subr.bf16.mxu0 0
    %235 = vmatpush1.bf16.msra.mxu0 0
    %236 = vmatprep.subr.bf16.mxu0 0
    %237 = vmatpush1.bf16.msra.mxu0 0
    %238 = vmatprep.subr.bf16.mxu0 0
    %239 = vmatpush1.bf16.msra.mxu0 0
    %240 = vmatprep.subr.bf16.mxu0 0
    %241 = vmatpush1.bf16.msra.mxu0 0
    %242 = vmatprep.subr.bf16.mxu0 0
    %243 = vmatpush1.bf16.msra.mxu0 0
    %244 = vmatprep.subr.bf16.mxu0 0
    %245 = vmatpush1.bf16.msra.mxu0 0
    %246 = vmatprep.subr.bf16.mxu0 0
    %247 = vmatpush1.bf16.msra.mxu0 0
    %248 = vmatprep.subr.bf16.mxu0 0
    %249 = vmatpush1.bf16.msra.mxu0 0
    %250 = vmatprep.mubr.bf16.mxu0 0
    %251 = vmatmul.mubr.bf16.gmra.mrb[0].mxu0 %v144
    %v252 = vpop.f32.mrb[0].mxu0
    %v253 = vadd.f32 %v168, %v252
    %v254 = vpop.f32.mrb[0].mxu0
    %v255 = vpop.f32.mrb[0].mxu0
    %v256 = vpop.f32.mrb[0].mxu0
    %257 = vdwg.mxu0
    %vm258 = vcmp.gt.f32.partialorder %v253, 0.0
    %v259 = vmul.f32 %v253, 0.01
    %v260 = vsel %vm258, %v253, %v259
    %v261 = vadd.f32 %v143, %v260
    %v262 = vpack.c.bf16 %v261, %v261
    %s263 = scalar_lea.vmem [#allocation2], 128
    %v264 = vld [vmem:[%s263] sm:$0xf]
    %v265 = vld [vmem:[%s263 + $0x4] sm:$0xf]
    %v266 = vld [vmem:[%s263 + $0x8] sm:$0xf]
    %v267 = vld [vmem:[%s263 + $0xc] sm:$0xf]
    %v268 = vld [vmem:[%s263 + $0x10] sm:$0xf]
    %v269 = vld [vmem:[%s263 + $0x14] sm:$0xf]
    %v270 = vld [vmem:[%s263 + $0x18] sm:$0xf]
    %v271 = vld [vmem:[%s263 + $0x1c] sm:$0xf]
    %v272 = vld [vmem:[%s263 + $0x20] sm:$0xf]
    %v273 = vld [vmem:[%s263 + $0x24] sm:$0xf]
    %v274 = vld [vmem:[%s263 + $0x28] sm:$0xf]
    %v275 = vld [vmem:[%s263 + $0x2c] sm:$0xf]
    %v276 = vld [vmem:[%s263 + $0x30] sm:$0xf]
    %v277 = vld [vmem:[%s263 + $0x34] sm:$0xf]
    %v278 = vld [vmem:[%s263 + $0x38] sm:$0xf]
    %v279 = vld [vmem:[%s263 + $0x3c] sm:$0xf]
    %s280 = scalar_lea.vmem %s2, 2
    %v281 = vld [vmem:[%s280] sm:$0x1]
    %v283 = vlaneseq
    %v284 = vshrl.u32 %v283, 7
    %v285 = vsub.s32 0, %v284
    %v286 = vrot.slane %v281, %v285
    %v304 = vunpack.c.l.b16 %v264
    %v305 = vunpack.c.l.b16 %v265
    %v306 = vunpack.c.l.b16 %v266
    %v307 = vunpack.c.l.b16 %v267
    %v308 = vunpack.c.l.b16 %v268
    %v309 = vunpack.c.l.b16 %v269
    %v310 = vunpack.c.l.b16 %v270
    %v311 = vunpack.c.l.b16 %v271
    %v312 = vunpack.c.l.b16 %v272
    %v313 = vunpack.c.l.b16 %v273
    %v314 = vunpack.c.l.b16 %v274
    %v315 = vunpack.c.l.b16 %v275
    %v316 = vunpack.c.l.b16 %v276
    %v317 = vunpack.c.l.b16 %v277
    %v318 = vunpack.c.l.b16 %v278
    %v319 = vunpack.c.l.b16 %v279
    %v320 = vpack.c.b16 %v305, %v304
    %v321 = vpack.c.b16 %v307, %v306
    %v322 = vpack.c.b16 %v309, %v308
    %v323 = vpack.c.b16 %v311, %v310
    %v324 = vpack.c.b16 %v313, %v312
    %v325 = vpack.c.b16 %v315, %v314
    %v326 = vpack.c.b16 %v317, %v316
    %v327 = vpack.c.b16 %v319, %v318
    %336 = vmatprep.subr.bf16.mxu0 0
    %337 = vmatpush1.bf16.msra.mxu0 %v320
    %338 = vmatprep.subr.bf16.mxu0 0
    %339 = vmatpush1.bf16.msra.mxu0 %v321
    %340 = vmatprep.subr.bf16.mxu0 0
    %341 = vmatpush1.bf16.msra.mxu0 %v322
    %342 = vmatprep.subr.bf16.mxu0 0
    %343 = vmatpush1.bf16.msra.mxu0 %v323
    %344 = vmatprep.subr.bf16.mxu0 0
    %345 = vmatpush1.bf16.msra.mxu0 %v324
    %346 = vmatprep.subr.bf16.mxu0 0
    %347 = vmatpush1.bf16.msra.mxu0 %v325
    %348 = vmatprep.subr.bf16.mxu0 0
    %349 = vmatpush1.bf16.msra.mxu0 %v326
    %350 = vmatprep.subr.bf16.mxu0 0
    %351 = vmatpush1.bf16.msra.mxu0 %v327
    %352 = vmatprep.subr.bf16.mxu0 0
    %353 = vmatpush1.bf16.msra.mxu0 0
    %354 = vmatprep.subr.bf16.mxu0 0
    %355 = vmatpush1.bf16.msra.mxu0 0
    %356 = vmatprep.subr.bf16.mxu0 0
    %357 = vmatpush1.bf16.msra.mxu0 0
    %358 = vmatprep.subr.bf16.mxu0 0
    %359 = vmatpush1.bf16.msra.mxu0 0
    %360 = vmatprep.subr.bf16.mxu0 0
    %361 = vmatpush1.bf16.msra.mxu0 0
    %362 = vmatprep.subr.bf16.mxu0 0
    %363 = vmatpush1.bf16.msra.mxu0 0
    %364 = vmatprep.subr.bf16.mxu0 0
    %365 = vmatpush1.bf16.msra.mxu0 0
    %366 = vmatprep.subr.bf16.mxu0 0
    %367 = vmatpush1.bf16.msra.mxu0 0
    %368 = vmatprep.mubr.bf16.mxu0 0
    %369 = vmatmul.mubr.bf16.gmra.mrb[0].mxu0 %v262
    %v370 = vpop.f32.mrb[0].mxu0
    %v371 = vadd.f32 %v286, %v370
    %v372 = vpop.f32.mrb[0].mxu0
    %v373 = vpop.f32.mrb[0].mxu0
    %v374 = vpop.f32.mrb[0].mxu0
    %375 = vdwg.mxu0
    %vm376 = vcmp.gt.f32.partialorder %v371, 0.0
    %v377 = vmul.f32 %v371, 0.01
    %v378 = vsel %vm376, %v371, %v377
    %v379 = vpack.c.bf16 %v378, %v378
    %s380 = scalar_lea.vmem [#allocation2], 192
    %v381 = vld [vmem:[%s380] sm:$0xf]
    %v382 = vld [vmem:[%s380 + $0x4] sm:$0xf]
    %v383 = vld [vmem:[%s380 + $0x8] sm:$0xf]
    %v384 = vld [vmem:[%s380 + $0xc] sm:$0xf]
    %v385 = vld [vmem:[%s380 + $0x10] sm:$0xf]
    %v386 = vld [vmem:[%s380 + $0x14] sm:$0xf]
    %v387 = vld [vmem:[%s380 + $0x18] sm:$0xf]
    %v388 = vld [vmem:[%s380 + $0x1c] sm:$0xf]
    %v389 = vld [vmem:[%s380 + $0x20] sm:$0xf]
    %v390 = vld [vmem:[%s380 + $0x24] sm:$0xf]
    %v391 = vld [vmem:[%s380 + $0x28] sm:$0xf]
    %v392 = vld [vmem:[%s380 + $0x2c] sm:$0xf]
    %v393 = vld [vmem:[%s380 + $0x30] sm:$0xf]
    %v394 = vld [vmem:[%s380 + $0x34] sm:$0xf]
    %v395 = vld [vmem:[%s380 + $0x38] sm:$0xf]
    %v396 = vld [vmem:[%s380 + $0x3c] sm:$0xf]
    %s397 = scalar_lea.vmem %s2, 3
    %v398 = vld [vmem:[%s397] sm:$0x1]
    %v400 = vlaneseq
    %v401 = vshrl.u32 %v400, 7
    %v402 = vsub.s32 0, %v401
    %v403 = vrot.slane %v398, %v402
    %v421 = vunpack.c.l.b16 %v381
    %v422 = vunpack.c.l.b16 %v382
    %v423 = vunpack.c.l.b16 %v383
    %v424 = vunpack.c.l.b16 %v384
    %v425 = vunpack.c.l.b16 %v385
    %v426 = vunpack.c.l.b16 %v386
    %v427 = vunpack.c.l.b16 %v387
    %v428 = vunpack.c.l.b16 %v388
    %v429 = vunpack.c.l.b16 %v389
    %v430 = vunpack.c.l.b16 %v390
    %v431 = vunpack.c.l.b16 %v391
    %v432 = vunpack.c.l.b16 %v392
    %v433 = vunpack.c.l.b16 %v393
    %v434 = vunpack.c.l.b16 %v394
    %v435 = vunpack.c.l.b16 %v395
    %v436 = vunpack.c.l.b16 %v396
    %v437 = vpack.c.b16 %v422, %v421
    %v438 = vpack.c.b16 %v424, %v423
    %v439 = vpack.c.b16 %v426, %v425
    %v440 = vpack.c.b16 %v428, %v427
    %v441 = vpack.c.b16 %v430, %v429
    %v442 = vpack.c.b16 %v432, %v431
    %v443 = vpack.c.b16 %v434, %v433
    %v444 = vpack.c.b16 %v436, %v435
    %453 = vmatprep.subr.bf16.mxu0 0
    %454 = vmatpush1.bf16.msra.mxu0 %v437
    %455 = vmatprep.subr.bf16.mxu0 0
    %456 = vmatpush1.bf16.msra.mxu0 %v438
    %457 = vmatprep.subr.bf16.mxu0 0
    %458 = vmatpush1.bf16.msra.mxu0 %v439
    %459 = vmatprep.subr.bf16.mxu0 0
    %460 = vmatpush1.bf16.msra.mxu0 %v440
    %461 = vmatprep.subr.bf16.mxu0 0
    %462 = vmatpush1.bf16.msra.mxu0 %v441
    %463 = vmatprep.subr.bf16.mxu0 0
    %464 = vmatpush1.bf16.msra.mxu0 %v442
    %465 = vmatprep.subr.bf16.mxu0 0
    %466 = vmatpush1.bf16.msra.mxu0 %v443
    %467 = vmatprep.subr.bf16.mxu0 0
    %468 = vmatpush1.bf16.msra.mxu0 %v444
    %469 = vmatprep.subr.bf16.mxu0 0
    %470 = vmatpush1.bf16.msra.mxu0 0
    %471 = vmatprep.subr.bf16.mxu0 0
    %472 = vmatpush1.bf16.msra.mxu0 0
    %473 = vmatprep.subr.bf16.mxu0 0
    %474 = vmatpush1.bf16.msra.mxu0 0
    %475 = vmatprep.subr.bf16.mxu0 0
    %476 = vmatpush1.bf16.msra.mxu0 0
    %477 = vmatprep.subr.bf16.mxu0 0
    %478 = vmatpush1.bf16.msra.mxu0 0
    %479 = vmatprep.subr.bf16.mxu0 0
    %480 = vmatpush1.bf16.msra.mxu0 0
    %481 = vmatprep.subr.bf16.mxu0 0
    %482 = vmatpush1.bf16.msra.mxu0 0
    %483 = vmatprep.subr.bf16.mxu0 0
    %484 = vmatpush1.bf16.msra.mxu0 0
    %485 = vmatprep.mubr.bf16.mxu0 0
    %486 = vmatmul.mubr.bf16.gmra.mrb[0].mxu0 %v379
    %v487 = vpop.f32.mrb[0].mxu0
    %v488 = vadd.f32 %v403, %v487
    %v489 = vpop.f32.mrb[0].mxu0
    %v490 = vpop.f32.mrb[0].mxu0
    %v491 = vpop.f32.mrb[0].mxu0
    %492 = vdwg.mxu0
    %493 = vst [vmem:[%s3] sm:$0xff] %v488
    // Predicated region
    $region18: #{qnet_forward.1} parent=1 // pred_check
      _
    $region19: #{qnet_forward.1} parent=1 // pred_check_branch
      %495 = sbr.rel (0) target = $region21
    $region20: #{qnet_forward.1} parent=1 // pred_region
      _
    $region21: #{qnet_forward.1} parent=1 // pred_fallthru
      _
    // Predicated region
    $region22: #{qnet_forward.1} parent=1 // pred_check
      _
    $region23: #{qnet_forward.1} parent=1 // pred_check_branch
      %497 = sbr.rel (0) target = $region25
    $region24: #{qnet_forward.1} parent=1 // pred_region
      _
    $region25: #{qnet_forward.1} parent=1 // pred_fallthru
      _
    %498 = vsyncpa [#allocation3], 1

</llo_original>
